<compile_context>
chip_gen: v7x
topology: tpu7x:2x2x1
jax: 0.10.0
libtpu: 0.0.40
codegen_flags: <defaults>
</compile_context>

<pallas_src>
import functools

import jax
import jax.numpy as jnp
from jax import lax
from jax.experimental import pallas as pl
from jax.experimental.pallas import tpu as pltpu

NEG_SLOPE = 0.2  # GATConv default LeakyReLU slope
LANE = 128
SUBLANE = 8


def _round_up(v, m):
    return ((v + m - 1) // m) * m


# ---------------------------------------------------------------------------
# Fused per-layer kernel: GATConv(heads=1) -> SAGEConv(mean, normalize=True)
# ---------------------------------------------------------------------------
def _gat_sage_kernel(x_ref, adj_ref, wg_ref, asrc_ref, adst_ref, bg_ref,
                     wsage_ref, bsage_ref, out_ref, *, n_dst, apply_relu):
    f32 = jnp.float32
    bf16 = jnp.bfloat16

    x_bf = x_ref[...]                                     # [N, Cp] bf16
    adj = adj_ref[...]                                    # [N, N]  bf16, adj[dst, src]
    n = adj.shape[0]

    # ---------------- GATConv (heads=1, concat=True, add_self_loops=True) -------------
    xw = jnp.dot(x_bf, wg_ref[...], preferred_element_type=f32)         # [N, Cp] f32
    xw_bf = xw.astype(bf16)                                              # cast once, reused

    # alpha_dst[i] = <xw[i], att_dst>  -- VPU lane reduction, natural column layout.
    a_dst = jnp.sum(xw * adst_ref[...], axis=-1, keepdims=True)          # [N, 1]
    # alpha_src[j] as a row vector: a degenerate matmul lands the result lane-major
    # directly (avoids an explicit [N,1]->[1,N] relayout/transpose).
    a_src = lax.dot_general(asrc_ref[...], xw_bf,
                            (((1,), (1,)), ((), ())),
                            preferred_element_type=f32)                  # [1, N]

    # e[i, j] = LeakyReLU(alpha_dst[i] + alpha_src[j])  for edge j -> i
    e = a_dst + a_src                                                    # [N, N]
    e = jnp.where(e > 0, e, NEG_SLOPE * e)

    # Edge mask with self-loops added in-kernel (diagonal via iota compare).
    rows = lax.broadcasted_iota(jnp.int32, (n, n), 0)
    cols = lax.broadcasted_iota(jnp.int32, (n, n), 1)
    mask = (adj > 0) | (rows == cols)
    e = jnp.where(mask, e, -1e30)

    # Row softmax over source nodes (f32; non-edges underflow to 0).
    e = e - jnp.max(e, axis=-1, keepdims=True)
    p = jnp.exp(e)
    p = p * pl.reciprocal(jnp.sum(p, axis=-1, keepdims=True), approx=True)

    # Attention-weighted aggregation + bias (dropout on p is eval-mode identity).
    h = jnp.dot(p.astype(bf16), xw_bf, preferred_element_type=f32) + bg_ref[...]  # [N, Cp]
    h_bf = h.astype(bf16)                                                # cast once

    # ---------------- SAGEConv((h, h[:n_dst]), edge_index), mean aggr -----------------
    adj_d = adj[:n_dst, :]                                               # [n_dst, N] bf16
    deg = jnp.sum(adj_d.astype(f32), axis=-1, keepdims=True)             # [n_dst, 1]
    agg = jnp.dot(adj_d, h_bf, preferred_element_type=f32)               # scatter-add
    mean = agg * jnp.where(deg > 0.0, 1.0 / deg, 0.0)                    # mean (0 if isolated)

    # Fused lin_l/lin_r: one K=2*Cp matmul on concat([mean, h_dst]) with stacked weights.
    cat = jnp.concatenate([mean, h[:n_dst]], axis=-1).astype(bf16)       # [n_dst, 2Cp]
    out = jnp.dot(cat, wsage_ref[...], preferred_element_type=f32) + bsage_ref[...]

    # normalize=True -> F.normalize(out, p=2, dim=-1)
    sumsq = jnp.sum(out * out, axis=-1, keepdims=True)
    inv_norm = jnp.where(sumsq > 0.0, lax.rsqrt(sumsq), 0.0)
    out = out * inv_norm

    if apply_relu:
        out = jnp.maximum(out, 0.0)
    out_ref[...] = out


def _vmem_spec():
    return pl.BlockSpec(memory_space=pltpu.MemorySpace.VMEM)


def gat_sage_layer(x, adj, wg, att_src, att_dst, bg, w_sage, b_sage, *,
                   n_dst, apply_relu):
    _, cp = x.shape
    kernel = functools.partial(_gat_sage_kernel, n_dst=n_dst, apply_relu=apply_relu)
    return pl.pallas_call(
        kernel,
        out_shape=jax.ShapeDtypeStruct((n_dst, cp), jnp.float32),
        in_specs=[_vmem_spec() for _ in range(8)],
        out_specs=_vmem_spec(),
    )(x, adj, wg, att_src, att_dst, bg, w_sage, b_sage)


def dense_adj(edge_index, n_nodes):
    """adj[dst, src] = 1.0 for each directed edge (src -> dst), stored bf16."""
    src, dst = edge_index[0], edge_index[1]
    return jnp.zeros((n_nodes, n_nodes), jnp.bfloat16).at[dst, src].set(1.0)


def _pad_to(a, shape, dtype=jnp.float32):
    out = jnp.zeros(shape, dtype)
    return out.at[tuple(slice(0, d) for d in a.shape)].set(a.astype(dtype))


# ---------------------------------------------------------------------------
# GlobalGraph (Pallas, eval mode)
# ---------------------------------------------------------------------------
class GlobalGraphPallas:
    def __init__(self, hidden_size, num_layers=2, key=jax.random.PRNGKey(0)):
        self.hidden_size = hidden_size
        self.num_layers = num_layers
        c = hidden_size
        cp = _round_up(c, LANE)                        # lane-dense padded channel dim
        self.cp = cp
        ks = jax.random.split(key, 4 + 3 * num_layers)
        s = 0.1
        bf16, f32 = jnp.bfloat16, jnp.float32
        # Shared GATConv parameters (heads=1): lin weight stored [in, out].
        self.gat_w = _pad_to(jax.random.normal(ks[0], (c, c)) * s, (cp, cp), bf16)
        self.gat_att_src = _pad_to(jax.random.normal(ks[1], (1, c)) * s, (1, cp), bf16)
        self.gat_att_dst = _pad_to(jax.random.normal(ks[2], (1, c)) * s, (1, cp), f32)
        self.gat_bias = _pad_to(jax.random.normal(ks[3], (1, c)) * s, (1, cp), f32)
        # Per-layer SAGEConv parameters: lin_l (bias) on neighbor mean, lin_r (no bias)
        # on target features, pre-stacked to a single [2*cp, cp] matrix (K=256 MXU fill).
        self.sage_w, self.sage_b = [], []
        for l in range(num_layers):
            k0, k1, k2 = ks[4 + 3 * l], ks[5 + 3 * l], ks[6 + 3 * l]
            wl = _pad_to(jax.random.normal(k0, (c, c)) * s, (cp, cp), bf16)
            wr = _pad_to(jax.random.normal(k2, (c, c)) * s, (cp, cp), bf16)
            self.sage_w.append(jnp.concatenate([wl, wr], axis=0))        # [2cp, cp]
            self.sage_b.append(_pad_to(jax.random.normal(k1, (1, c)) * s, (1, cp), f32))

    def forward(self, x, adjs):
        if x.ndim < 2:
            x = x[None, :]
        n = x.shape[0]
        n_pad = _round_up(n, SUBLANE)                  # sublane-aligned node count
        xp = _pad_to(x, (n_pad, self.cp), jnp.bfloat16)

        # Dead-layer skip: the reference resets x = x_all every iteration, so only the
        # final sampler layer contributes to the returned tensor.  Run just adjs[-1]
        # with that layer's SAGE weights and the relu gating of the last loop index.
        i = len(adjs) - 1
        edge_index, _, size = adjs[i]
        n_dst = int(size[1])
        n_dst_pad = min(_round_up(n_dst, SUBLANE), n_pad)
        apply_relu = (i != self.num_layers - 1)

        adj = dense_adj(edge_index, n_pad)             # [n_pad, n_pad] bf16
        out = gat_sage_layer(
            xp, adj, self.gat_w, self.gat_att_src, self.gat_att_dst, self.gat_bias,
            self.sage_w[i], self.sage_b[i],
            n_dst=n_dst_pad, apply_relu=apply_relu)
        return out[:n_dst, :self.hidden_size]          # strip row/channel padding


if __name__ == "__main__":
    hidden_size = 32
    n_nodes = 16
    key = jax.random.PRNGKey(0)
    k_x, k_p, k_e0, k_e1 = jax.random.split(key, 4)

    # Node features [N, hidden].
    x = jax.random.normal(k_x, (n_nodes, hidden_size), jnp.float32)

    # Sampler layer 0: 32 edges among all 16 nodes, size = (16, 16).
    src0 = jax.random.randint(k_e0, (32,), 0, n_nodes)
    dst0 = jax.random.randint(jax.random.fold_in(k_e0, 1), (32,), 0, n_nodes)
    edge_index0 = jnp.stack([src0, dst0]).astype(jnp.int32)
    size0 = (n_nodes, n_nodes)

    # Sampler layer 1: 24 edges into the 8 target nodes, size = (16, 8).
    src1 = jax.random.randint(k_e1, (24,), 0, n_nodes)
    dst1 = jax.random.randint(jax.random.fold_in(k_e1, 1), (24,), 0, 8)
    edge_index1 = jnp.stack([src1, dst1]).astype(jnp.int32)
    size1 = (n_nodes, 8)

    adjs = [(edge_index0, None, size0), (edge_index1, None, size1)]

    model = GlobalGraphPallas(hidden_size, num_layers=2, key=k_p)
    out = model.forward(x, adjs)
    out = jax.block_until_ready(out)
    assert out.shape == (size1[1], hidden_size)
    print("KERNEL_OK")
</pallas_src>

<mosaic_0001>
module attributes {stable_mosaic.version = 11 : i64} {
  func.func @_gat_sage_kernel(%arg0: memref<16x128xbf16, #tpu.memory_space<vmem>>, %arg1: memref<16x16xbf16, #tpu.memory_space<vmem>>, %arg2: memref<128x128xbf16, #tpu.memory_space<vmem>>, %arg3: memref<1x128xbf16, #tpu.memory_space<vmem>>, %arg4: memref<1x128xf32, #tpu.memory_space<vmem>>, %arg5: memref<1x128xf32, #tpu.memory_space<vmem>>, %arg6: memref<256x128xbf16, #tpu.memory_space<vmem>>, %arg7: memref<1x128xf32, #tpu.memory_space<vmem>>, %arg8: memref<8x128xf32, #tpu.memory_space<vmem>>) attributes {dimension_semantics = [], scalar_prefetch = 0 : i64, scratch_operands = 0 : i64, tpu.core_type = #tpu.core_type<tc>} {
    %c0 = arith.constant 0 : index
    %c0_0 = arith.constant 0 : index
    %0 = vector.load %arg0[%c0, %c0_0] : memref<16x128xbf16, #tpu.memory_space<vmem>>, vector<16x128xbf16>
    %c0_1 = arith.constant 0 : index
    %c0_2 = arith.constant 0 : index
    %1 = vector.load %arg1[%c0_1, %c0_2] : memref<16x16xbf16, #tpu.memory_space<vmem>>, vector<16x16xbf16>
    %c0_3 = arith.constant 0 : index
    %c0_4 = arith.constant 0 : index
    %2 = vector.load %arg2[%c0_3, %c0_4] : memref<128x128xbf16, #tpu.memory_space<vmem>>, vector<128x128xbf16>
    %cst = arith.constant dense<0.000000e+00> : vector<16x128xf32>
    %3 = tpu.matmul %0, %2, %cst {dimension_numbers = #tpu.dot_dimension_numbers<[1], [0], [0], [1], [0, 0, 1, 1], [], []>} : vector<16x128xbf16>, vector<128x128xbf16>, vector<16x128xf32> -> vector<16x128xf32>
    %4 = arith.truncf %3 : vector<16x128xf32> to vector<16x128xbf16>
    %c0_5 = arith.constant 0 : index
    %c0_6 = arith.constant 0 : index
    %5 = vector.load %arg4[%c0_5, %c0_6] : memref<1x128xf32, #tpu.memory_space<vmem>>, vector<1x128xf32>
    %6 = vector.broadcast %5 : vector<1x128xf32> to vector<16x128xf32>
    %7 = arith.mulf %3, %6 : vector<16x128xf32>
    %cst_7 = arith.constant dense<0.000000e+00> : vector<16xf32>
    %8 = vector.multi_reduction <add>, %7, %cst_7 [1] : vector<16x128xf32> to vector<16xf32>
    %9 = vector.shape_cast %8 : vector<16xf32> to vector<16x1xf32>
    %c0_8 = arith.constant 0 : index
    %c0_9 = arith.constant 0 : index
    %10 = vector.load %arg3[%c0_8, %c0_9] : memref<1x128xbf16, #tpu.memory_space<vmem>>, vector<1x128xbf16>
    %cst_10 = arith.constant dense<0.000000e+00> : vector<1x16xf32>
    %11 = tpu.matmul %10, %4, %cst_10 {dimension_numbers = #tpu.dot_dimension_numbers<[1], [1], [0], [0], [0, 0, 1, 0], [], []>} : vector<1x128xbf16>, vector<16x128xbf16>, vector<1x16xf32> -> vector<1x16xf32>
    %12 = vector.broadcast %9 : vector<16x1xf32> to vector<16x16xf32>
    %13 = vector.broadcast %11 : vector<1x16xf32> to vector<16x16xf32>
    %14 = arith.addf %12, %13 : vector<16x16xf32>
    %cst_11 = arith.constant 0.000000e+00 : f32
    %15 = vector.broadcast %cst_11 : f32 to vector<16x16xf32>
    %16 = arith.cmpf ogt, %14, %15 : vector<16x16xf32>
    %cst_12 = arith.constant 2.000000e-01 : f32
    %17 = vector.broadcast %cst_12 : f32 to vector<16x16xf32>
    %18 = arith.mulf %17, %14 : vector<16x16xf32>
    %19 = arith.select %16, %14, %18 : vector<16x16xi1>, vector<16x16xf32>
    %20 = tpu.iota {dimensions = array<i32: 0>} : vector<16x16xi32>
    %21 = tpu.iota {dimensions = array<i32: 1>} : vector<16x16xi32>
    %cst_13 = arith.constant 0.000000e+00 : bf16
    %22 = vector.broadcast %cst_13 : bf16 to vector<16x16xbf16>
    %23 = arith.cmpf ogt, %1, %22 : vector<16x16xbf16>
    %24 = arith.cmpi eq, %20, %21 : vector<16x16xi32>
    %25 = arith.ori %23, %24 : vector<16x16xi1>
    %cst_14 = arith.constant -1.000000e+30 : f32
    %26 = vector.broadcast %cst_14 : f32 to vector<16x16xf32>
    %27 = arith.select %25, %19, %26 : vector<16x16xi1>, vector<16x16xf32>
    %cst_15 = arith.constant dense<0xFF800000> : vector<16xf32>
    %28 = vector.multi_reduction <maximumf>, %27, %cst_15 [1] : vector<16x16xf32> to vector<16xf32>
    %29 = vector.shape_cast %28 : vector<16xf32> to vector<16x1xf32>
    %30 = vector.broadcast %29 : vector<16x1xf32> to vector<16x16xf32>
    %31 = arith.subf %27, %30 : vector<16x16xf32>
    %32 = math.exp %31 : vector<16x16xf32>
    %cst_16 = arith.constant dense<0.000000e+00> : vector<16xf32>
    %33 = vector.multi_reduction <add>, %32, %cst_16 [1] : vector<16x16xf32> to vector<16xf32>
    %34 = vector.shape_cast %33 : vector<16xf32> to vector<16x1xf32>
    %35 = tpu.reciprocal %34 {approx = true} : vector<16x1xf32> -> vector<16x1xf32>
    %36 = vector.broadcast %35 : vector<16x1xf32> to vector<16x16xf32>
    %37 = arith.mulf %32, %36 : vector<16x16xf32>
    %38 = arith.truncf %37 : vector<16x16xf32> to vector<16x16xbf16>
    %cst_17 = arith.constant dense<0.000000e+00> : vector<16x128xf32>
    %39 = tpu.matmul %38, %4, %cst_17 {dimension_numbers = #tpu.dot_dimension_numbers<[1], [0], [0], [1], [0, 0, 1, 1], [], []>} : vector<16x16xbf16>, vector<16x128xbf16>, vector<16x128xf32> -> vector<16x128xf32>
    %c0_18 = arith.constant 0 : index
    %c0_19 = arith.constant 0 : index
    %40 = vector.load %arg5[%c0_18, %c0_19] : memref<1x128xf32, #tpu.memory_space<vmem>>, vector<1x128xf32>
    %41 = vector.broadcast %40 : vector<1x128xf32> to vector<16x128xf32>
    %42 = arith.addf %39, %41 : vector<16x128xf32>
    %43 = arith.truncf %42 : vector<16x128xf32> to vector<16x128xbf16>
    %44 = vector.extract_strided_slice %1 {offsets = [0, 0], sizes = [8, 16], strides = [1, 1]} : vector<16x16xbf16> to vector<8x16xbf16>
    %45 = arith.extf %44 : vector<8x16xbf16> to vector<8x16xf32>
    %cst_20 = arith.constant dense<0.000000e+00> : vector<8xf32>
    %46 = vector.multi_reduction <add>, %45, %cst_20 [1] : vector<8x16xf32> to vector<8xf32>
    %47 = vector.shape_cast %46 : vector<8xf32> to vector<8x1xf32>
    %cst_21 = arith.constant dense<0.000000e+00> : vector<8x128xf32>
    %48 = tpu.matmul %44, %43, %cst_21 {dimension_numbers = #tpu.dot_dimension_numbers<[1], [0], [0], [1], [0, 0, 1, 1], [], []>} : vector<8x16xbf16>, vector<16x128xbf16>, vector<8x128xf32> -> vector<8x128xf32>
    %cst_22 = arith.constant 0.000000e+00 : f32
    %49 = vector.broadcast %cst_22 : f32 to vector<8x1xf32>
    %50 = arith.cmpf ogt, %47, %49 : vector<8x1xf32>
    %cst_23 = arith.constant 1.000000e+00 : f32
    %51 = vector.broadcast %cst_23 : f32 to vector<8x1xf32>
    %52 = arith.divf %51, %47 : vector<8x1xf32>
    %cst_24 = arith.constant 0.000000e+00 : f32
    %53 = vector.broadcast %cst_24 : f32 to vector<8x1xf32>
    %54 = arith.select %50, %52, %53 : vector<8x1xi1>, vector<8x1xf32>
    %55 = vector.broadcast %54 : vector<8x1xf32> to vector<8x128xf32>
    %56 = arith.mulf %48, %55 : vector<8x128xf32>
    %57 = vector.extract_strided_slice %42 {offsets = [0, 0], sizes = [8, 128], strides = [1, 1]} : vector<16x128xf32> to vector<8x128xf32>
    %58 = tpu.concatenate %56, %57 in 1 : vector<8x128xf32>, vector<8x128xf32> -> vector<8x256xf32>
    %59 = arith.truncf %58 : vector<8x256xf32> to vector<8x256xbf16>
    %c0_25 = arith.constant 0 : index
    %c0_26 = arith.constant 0 : index
    %60 = vector.load %arg6[%c0_25, %c0_26] : memref<256x128xbf16, #tpu.memory_space<vmem>>, vector<256x128xbf16>
    %cst_27 = arith.constant dense<0.000000e+00> : vector<8x128xf32>
    %61 = tpu.matmul %59, %60, %cst_27 {dimension_numbers = #tpu.dot_dimension_numbers<[1], [0], [0], [1], [0, 0, 1, 1], [], []>} : vector<8x256xbf16>, vector<256x128xbf16>, vector<8x128xf32> -> vector<8x128xf32>
    %c0_28 = arith.constant 0 : index
    %c0_29 = arith.constant 0 : index
    %62 = vector.load %arg7[%c0_28, %c0_29] : memref<1x128xf32, #tpu.memory_space<vmem>>, vector<1x128xf32>
    %63 = vector.broadcast %62 : vector<1x128xf32> to vector<8x128xf32>
    %64 = arith.addf %61, %63 : vector<8x128xf32>
    %65 = arith.mulf %64, %64 : vector<8x128xf32>
    %cst_30 = arith.constant dense<0.000000e+00> : vector<8xf32>
    %66 = vector.multi_reduction <add>, %65, %cst_30 [1] : vector<8x128xf32> to vector<8xf32>
    %67 = vector.shape_cast %66 : vector<8xf32> to vector<8x1xf32>
    %cst_31 = arith.constant 0.000000e+00 : f32
    %68 = vector.broadcast %cst_31 : f32 to vector<8x1xf32>
    %69 = arith.cmpf ogt, %67, %68 : vector<8x1xf32>
    %70 = math.rsqrt %67 : vector<8x1xf32>
    %cst_32 = arith.constant 0.000000e+00 : f32
    %71 = vector.broadcast %cst_32 : f32 to vector<8x1xf32>
    %72 = arith.select %69, %70, %71 : vector<8x1xi1>, vector<8x1xf32>
    %73 = vector.broadcast %72 : vector<8x1xf32> to vector<8x128xf32>
    %74 = arith.mulf %64, %73 : vector<8x128xf32>
    %c0_33 = arith.constant 0 : index
    %c0_34 = arith.constant 0 : index
    %75 = vector.load %arg8[%c0_33, %c0_34] : memref<8x128xf32, #tpu.memory_space<vmem>>, vector<8x128xf32>
    tpu.vector_store %arg8[%c0_33, %c0_34], %74 {strides = array<i32>} : memref<8x128xf32, #tpu.memory_space<vmem>>, vector<8x128xf32>,
    return
  }
}

</mosaic_0001>

<llo_original>
// kernel: tpu_custom_call.1
$region0: #{tpu_custom_call.1}
  #allocation0 [shape = 'u32[]', space=smem, size = 0x4, offset = 0x4, fixed_abs, tag = 'smem constant byte address 0x4 - core index']
  #allocation1 [shape = 'u32[144,128]{1,0:T(1,128)}', space=vmem, size = 0x12000, scoped, tag = 'internal scratch']
  %s0 = inlined_call_operand.hbm [shape: bf16[16,128], index: 0, kind: input, shape index: {}]
  %s1 = inlined_call_operand.hbm [shape: bf16[16,16], index: 1, kind: input, shape index: {}]
  %s2 = inlined_call_operand.hbm [shape: bf16[128,128], index: 2, kind: input, shape index: {}]
  %s3 = inlined_call_operand.vmem [shape: bf16[1,128], index: 3, kind: input, shape index: {}]
  %s4 = inlined_call_operand.vmem [shape: f32[1,128], index: 4, kind: input, shape index: {}]
  %s5 = inlined_call_operand.vmem [shape: f32[1,128], index: 5, kind: input, shape index: {}]
  %s6 = inlined_call_operand.hbm [shape: bf16[256,128], index: 6, kind: input, shape index: {}]
  %s7 = inlined_call_operand.vmem [shape: f32[1,128], index: 7, kind: input, shape index: {}]
  %s8 = inlined_call_operand.hbm [shape: f32[8,128], index: 8, kind: output, shape index: {}]
  %s9 = sld [smem:[#allocation0]]
  $region58: #{tpu_custom_call.1} parent=0
    _
  %s11 = ssub.s32 1, %s9
  %s12 = scalar_select 0, %s11, %s9
  $region1: #{tpu_custom_call.1} parent=0
    #allocation2 [shape = 'u8[4096]{0}', space=vmem, size = 0x1000, scoped, tag = 'input window, operand 0, single buffered']
    #allocation3 [shape = 's32[1]{0}', space=sflag, size = 0x4, scoped, tag = 'scoped memory for tpu_custom_call.1']
    #allocation4 [shape = 's32[1]{0}', space=sflag, size = 0x4, scoped, tag = 'scoped memory for tpu_custom_call.1']
    #allocation5 [shape = 'u8[4096]{0}', space=vmem, size = 0x1000, scoped, tag = 'input window, operand 1, single buffered']
    #allocation6 [shape = 's32[1]{0}', space=sflag, size = 0x4, scoped, tag = 'scoped memory for tpu_custom_call.1']
    #allocation7 [shape = 'u8[32768]{0}', space=vmem, size = 0x8000, scoped, tag = 'input window, operand 2, single buffered']
    #allocation8 [shape = 'u8[65536]{0}', space=vmem, size = 0x10000, scoped, tag = 'input window, operand 6, single buffered']
    #allocation9 [shape = 's32[1]{0}', space=sflag, size = 0x4, scoped, tag = 'scoped memory for tpu_custom_call.1']
    #allocation10 [shape = 'u8[4096]{0}', space=vmem, size = 0x1000, scoped, tag = 'output window, operand 0, single buffered']
    %13 = vsyncpa [#allocation3], 0
    %14 = vsyncpa [#allocation6], 0
    %15 = vsyncpa [#allocation9], 0
    %16 = vsyncpa [#allocation4], 0
    // Predicated region
    $region2: #{tpu_custom_call.1} parent=1 // pred_check
      _
    $region3: #{tpu_custom_call.1} parent=1 // pred_check_branch
      %18 = sbr.rel (0) target = $region5
    $region4: #{tpu_custom_call.1} parent=1 // pred_region
      %s20 = ssub.s32 128, 128
      %21 = vsyncadd [#allocation3], %s20
      %s22 = sshll.u32 [#allocation2], 4
      %s23 = int_to_ptr.vmem [resolvable:$true] %s22
      %28 = dma.hbm_to_vmem [thread:$0]  %s0, 128, %s23, [#allocation3], 64, 64, 4
    $region5: #{tpu_custom_call.1} parent=1 // pred_fallthru
      _
    // Predicated region
    $region6: #{tpu_custom_call.1} parent=1 // pred_check
      _
    $region7: #{tpu_custom_call.1} parent=1 // pred_check_branch
      %30 = sbr.rel (0) target = $region9
    $region8: #{tpu_custom_call.1} parent=1 // pred_region
      %s32 = ssub.s32 128, 128
      %33 = vsyncadd [#allocation6], %s32
      %s34 = sshll.u32 [#allocation5], 4
      %s35 = int_to_ptr.vmem [resolvable:$true] %s34
      %40 = dma.hbm_to_vmem [thread:$0]  %s1, 128, %s35, [#allocation6], 64, 64, 4
    $region9: #{tpu_custom_call.1} parent=1 // pred_fallthru
      _
    // Predicated region
    $region10: #{tpu_custom_call.1} parent=1 // pred_check
      _
    $region11: #{tpu_custom_call.1} parent=1 // pred_check_branch
      %42 = sbr.rel (0) target = $region13
    $region12: #{tpu_custom_call.1} parent=1 // pred_region
      %s44 = ssub.s32 1024, 1024
      %45 = vsyncadd [#allocation6], %s44
      %s46 = sshll.u32 [#allocation7], 4
      %s47 = int_to_ptr.vmem [resolvable:$true] %s46
      %52 = dma.hbm_to_vmem [thread:$0]  %s2, 1024, %s47, [#allocation6], 64, 64, 4
    $region13: #{tpu_custom_call.1} parent=1 // pred_fallthru
      _
    // Predicated region
    $region14: #{tpu_custom_call.1} parent=1 // pred_check
      _
    $region15: #{tpu_custom_call.1} parent=1 // pred_check_branch
      %54 = sbr.rel (0) target = $region17
    $region16: #{tpu_custom_call.1} parent=1 // pred_region
      _
    $region17: #{tpu_custom_call.1} parent=1 // pred_fallthru
      _
    // Predicated region
    $region18: #{tpu_custom_call.1} parent=1 // pred_check
      _
    $region19: #{tpu_custom_call.1} parent=1 // pred_check_branch
      %56 = sbr.rel (0) target = $region21
    $region20: #{tpu_custom_call.1} parent=1 // pred_region
      _
    $region21: #{tpu_custom_call.1} parent=1 // pred_fallthru
      _
    // Predicated region
    $region22: #{tpu_custom_call.1} parent=1 // pred_check
      _
    $region23: #{tpu_custom_call.1} parent=1 // pred_check_branch
      %58 = sbr.rel (0) target = $region25
    $region24: #{tpu_custom_call.1} parent=1 // pred_region
      _
    $region25: #{tpu_custom_call.1} parent=1 // pred_fallthru
      _
    // Predicated region
    $region26: #{tpu_custom_call.1} parent=1 // pred_check
      _
    $region27: #{tpu_custom_call.1} parent=1 // pred_check_branch
      %60 = sbr.rel (0) target = $region29
    $region28: #{tpu_custom_call.1} parent=1 // pred_region
      %s62 = ssub.s32 2048, 2048
      %63 = vsyncadd [#allocation9], %s62
      %s64 = sshll.u32 [#allocation8], 4
      %s65 = int_to_ptr.vmem [resolvable:$true] %s64
      %70 = dma.hbm_to_vmem [thread:$0]  %s6, 2048, %s65, [#allocation9], 64, 64, 4
    $region29: #{tpu_custom_call.1} parent=1 // pred_fallthru
      _
    // Predicated region
    $region30: #{tpu_custom_call.1} parent=1 // pred_check
      _
    $region31: #{tpu_custom_call.1} parent=1 // pred_check_branch
      %72 = sbr.rel (0) target = $region33
    $region32: #{tpu_custom_call.1} parent=1 // pred_region
      _
    $region33: #{tpu_custom_call.1} parent=1 // pred_fallthru
      _
    // Predicated region
    $region34: #{tpu_custom_call.1} parent=1 // pred_check
      _
    $region35: #{tpu_custom_call.1} parent=1 // pred_check_branch
      %74 = sbr.rel (0) target = $region37
    $region36: #{tpu_custom_call.1} parent=1 // pred_region
      %75 = dma.done [#allocation3], 128
    $region37: #{tpu_custom_call.1} parent=1 // pred_fallthru
      _
    // Predicated region
    $region38: #{tpu_custom_call.1} parent=1 // pred_check
      _
    $region39: #{tpu_custom_call.1} parent=1 // pred_check_branch
      %77 = sbr.rel (0) target = $region41
    $region40: #{tpu_custom_call.1} parent=1 // pred_region
      %78 = dma.done [#allocation6], 128
    $region41: #{tpu_custom_call.1} parent=1 // pred_fallthru
      _
    // Predicated region
    $region42: #{tpu_custom_call.1} parent=1 // pred_check
      _
    $region43: #{tpu_custom_call.1} parent=1 // pred_check_branch
      %80 = sbr.rel (0) target = $region45
    $region44: #{tpu_custom_call.1} parent=1 // pred_region
      %81 = dma.done [#allocation6], 1024
    $region45: #{tpu_custom_call.1} parent=1 // pred_fallthru
      _
    // Predicated region
    $region46: #{tpu_custom_call.1} parent=1 // pred_check
      _
    $region47: #{tpu_custom_call.1} parent=1 // pred_check_branch
      %83 = sbr.rel (0) target = $region49
    $region48: #{tpu_custom_call.1} parent=1 // pred_region
      %84 = dma.done [#allocation9], 2048
    $region49: #{tpu_custom_call.1} parent=1 // pred_fallthru
      _
    %v88 = vld [vmem:[#allocation2] sm:$0xf]
    %v89 = vld [vmem:[#allocation2 + $0x4] sm:$0xf]
    %v90 = vld [vmem:[#allocation5] sm:$0xf]
    %v91 = vld [vmem:[#allocation5 + $0x4] sm:$0xf]
    %v92 = vld [vmem:[#allocation7] sm:$0xf]
    %v93 = vld [vmem:[#allocation7 + $0x4] sm:$0xf]
    %v94 = vld [vmem:[#allocation7 + $0x8] sm:$0xf]
    %v95 = vld [vmem:[#allocation7 + $0xc] sm:$0xf]
    %v96 = vld [vmem:[#allocation7 + $0x10] sm:$0xf]
    %v97 = vld [vmem:[#allocation7 + $0x14] sm:$0xf]
    %v98 = vld [vmem:[#allocation7 + $0x18] sm:$0xf]
    %v99 = vld [vmem:[#allocation7 + $0x1c] sm:$0xf]
    %v100 = vld [vmem:[#allocation7 + $0x20] sm:$0xf]
    %v101 = vld [vmem:[#allocation7 + $0x24] sm:$0xf]
    %v102 = vld [vmem:[#allocation7 + $0x28] sm:$0xf]
    %v103 = vld [vmem:[#allocation7 + $0x2c] sm:$0xf]
    %v104 = vld [vmem:[#allocation7 + $0x30] sm:$0xf]
    %v105 = vld [vmem:[#allocation7 + $0x34] sm:$0xf]
    %v106 = vld [vmem:[#allocation7 + $0x38] sm:$0xf]
    %v107 = vld [vmem:[#allocation7 + $0x3c] sm:$0xf]
    %v110 = vunpack.c.l.b16 %v88
    %v111 = vunpack.c.l.b16 %v89
    %v112 = vpack.c.b16 %v111, %v110
    %v130 = vunpack.c.l.b16 %v92
    %v131 = vunpack.c.l.b16 %v93
    %v132 = vunpack.c.l.b16 %v94
    %v133 = vunpack.c.l.b16 %v95
    %v134 = vunpack.c.l.b16 %v96
    %v135 = vunpack.c.l.b16 %v97
    %v136 = vunpack.c.l.b16 %v98
    %v137 = vunpack.c.l.b16 %v99
    %v138 = vunpack.c.l.b16 %v100
    %v139 = vunpack.c.l.b16 %v101
    %v140 = vunpack.c.l.b16 %v102
    %v141 = vunpack.c.l.b16 %v103
    %v142 = vunpack.c.l.b16 %v104
    %v143 = vunpack.c.l.b16 %v105
    %v144 = vunpack.c.l.b16 %v106
    %v145 = vunpack.c.l.b16 %v107
    %v146 = vpack.c.b16 %v131, %v130
    %v147 = vpack.c.b16 %v133, %v132
    %v148 = vpack.c.b16 %v135, %v134
    %v149 = vpack.c.b16 %v137, %v136
    %v150 = vpack.c.b16 %v139, %v138
    %v151 = vpack.c.b16 %v141, %v140
    %v152 = vpack.c.b16 %v143, %v142
    %v153 = vpack.c.b16 %v145, %v144
    %162 = vmatprep.subr.bf16.mxu0 0
    %163 = vmatpush1.bf16.msra.mxu0 %v146
    %164 = vmatprep.subr.bf16.mxu0 0
    %165 = vmatpush1.bf16.msra.mxu0 %v147
    %166 = vmatprep.subr.bf16.mxu0 0
    %167 = vmatpush1.bf16.msra.mxu0 %v148
    %168 = vmatprep.subr.bf16.mxu0 0
    %169 = vmatpush1.bf16.msra.mxu0 %v149
    %170 = vmatprep.subr.bf16.mxu0 0
    %171 = vmatpush1.bf16.msra.mxu0 %v150
    %172 = vmatprep.subr.bf16.mxu0 0
    %173 = vmatpush1.bf16.msra.mxu0 %v151
    %174 = vmatprep.subr.bf16.mxu0 0
    %175 = vmatpush1.bf16.msra.mxu0 %v152
    %176 = vmatprep.subr.bf16.mxu0 0
    %177 = vmatpush1.bf16.msra.mxu0 %v153
    %178 = vmatprep.subr.bf16.mxu0 0
    %179 = vmatpush1.bf16.msra.mxu0 0
    %180 = vmatprep.subr.bf16.mxu0 0
    %181 = vmatpush1.bf16.msra.mxu0 0
    %182 = vmatprep.subr.bf16.mxu0 0
    %183 = vmatpush1.bf16.msra.mxu0 0
    %184 = vmatprep.subr.bf16.mxu0 0
    %185 = vmatpush1.bf16.msra.mxu0 0
    %186 = vmatprep.subr.bf16.mxu0 0
    %187 = vmatpush1.bf16.msra.mxu0 0
    %188 = vmatprep.subr.bf16.mxu0 0
    %189 = vmatpush1.bf16.msra.mxu0 0
    %190 = vmatprep.subr.bf16.mxu0 0
    %191 = vmatpush1.bf16.msra.mxu0 0
    %192 = vmatprep.subr.bf16.mxu0 0
    %193 = vmatpush1.bf16.msra.mxu0 0
    %194 = vmatprep.mubr.bf16.mxu0 0
    %195 = vmatmul.mubr.bf16.gmra.mrb[0].mxu0 %v112
    %v196 = vpop.f32.mrb[0].mxu0
    %v197 = vadd.f32 0.0, %v196
    %v198 = vpop.f32.mrb[0].mxu0
    %v199 = vpop.f32.mrb[0].mxu0
    %v200 = vadd.f32 0.0, %v199
    %v201 = vpop.f32.mrb[0].mxu0
    %202 = vdwg.mxu0
    %v203 = vpack.c.bf16 %v200, %v197
    %v204 = vld [vmem:[%s4] sm:$0x1]
    %v206 = vlaneseq
    %v207 = vshrl.u32 %v206, 7
    %v208 = vsub.s32 0, %v207
    %v209 = vrot.slane %v204, %v208
    %v211 = vmul.f32 %v197, %v209
    %v212 = vmul.f32 %v200, %v209
    %213 = vadd.xlane.f32.xlu0 %v211
    %v214 = vpop.xlane.xlu0 %213
    %215 = vadd.xlane.f32.xlu0 %v212
    %v216 = vpop.xlane.xlu0 %215
    %v217 = vld [vmem:[%s3] sm:$0x1]
    %218 = vmatprep.subr.bf16.mxu0 0
    %219 = vmatpush1.bf16.xpose.msra.mxu0 %v203
    %220 = vmatprep.subr.bf16.mxu0 0
    %221 = vmatpush1.bf16.xpose.msra.mxu0 0
    %222 = vmatprep.subr.bf16.mxu0 0
    %223 = vmatpush1.bf16.xpose.msra.mxu0 0
    %224 = vmatprep.subr.bf16.mxu0 0
    %225 = vmatpush1.bf16.xpose.msra.mxu0 0
    %226 = vmatprep.subr.bf16.mxu0 0
    %227 = vmatpush1.bf16.xpose.msra.mxu0 0
    %228 = vmatprep.subr.bf16.mxu0 0
    %229 = vmatpush1.bf16.xpose.msra.mxu0 0
    %230 = vmatprep.subr.bf16.mxu0 0
    %231 = vmatpush1.bf16.xpose.msra.mxu0 0
    %232 = vmatprep.subr.bf16.mxu0 0
    %233 = vmatpush1.bf16.xpose.msra.mxu0 0
    %234 = vmatprep.subr.bf16.mxu0 0
    %235 = vmatpush1.bf16.xpose.msra.mxu0 0
    %236 = vmatprep.subr.bf16.mxu0 0
    %237 = vmatpush1.bf16.xpose.msra.mxu0 0
    %238 = vmatprep.subr.bf16.mxu0 0
    %239 = vmatpush1.bf16.xpose.msra.mxu0 0
    %240 = vmatprep.subr.bf16.mxu0 0
    %241 = vmatpush1.bf16.xpose.msra.mxu0 0
    %242 = vmatprep.subr.bf16.mxu0 0
    %243 = vmatpush1.bf16.xpose.msra.mxu0 0
    %244 = vmatprep.subr.bf16.mxu0 0
    %245 = vmatpush1.bf16.xpose.msra.mxu0 0
    %246 = vmatprep.subr.bf16.mxu0 0
    %247 = vmatpush1.bf16.xpose.msra.mxu0 0
    %248 = vmatprep.subr.bf16.mxu0 0
    %249 = vmatpush1.bf16.xpose.msra.mxu0 0
    %250 = vmatprep.mubr.bf16.mxu0 0
    %251 = vmatmul.mubr.bf16.gmra.mrb[0].mxu0 %v217
    %v252 = vpop.f32.mrb[0].mxu0
    %v253 = vadd.f32 0.0, %v252
    %v254 = vpop.f32.mrb[0].mxu0
    %v255 = vpop.f32.mrb[0].mxu0
    %v256 = vpop.f32.mrb[0].mxu0
    %257 = vdwg.mxu0
    %v258 = vlaneseq
    %v259 = vshrl.u32 %v258, 7
    %v260 = vsub.s32 0, %v259
    %v261 = vrot.slane %v253, %v260
    %v262 = vadd.f32 %v214, %v261
    %v263 = vadd.f32 %v216, %v261
    %vm264 = vcmp.gt.f32.partialorder %v262, 0.0
    %vm265 = vcmp.gt.f32.partialorder %v263, 0.0
    %v266 = vmul.f32 %v262, 0.2
    %v267 = vmul.f32 %v263, 0.2
    %v268 = vsel %vm264, %v262, %v266
    %v269 = vsel %vm265, %v263, %v267
    %v270 = vlaneseq
    %v271 = vshrl.u32 %v270, 7
    %v272 = vadd.s32 %v271, 8
    %v273 = vlaneseq
    %v274 = vand.u32 %v273, 127
    %vm275 = vcmp.gt.bf16.partialorder %v90, 0
    %vm276 = vcmp.gt.bf16.partialorder %v91, 0
    %vm277 = vcmp.eq.s32.totalorder %v271, %v274
    %vm278 = vcmp.eq.s32.totalorder %v272, %v274
    %vm279 = vmpackc.low %vm277, %vm277
    %vm280 = vmpackc.low %vm278, %vm278
    %vm281 = vmor %vm275, %vm279
    %vm282 = vmor %vm276, %vm280
    %v283 = vsel %vm281, 65537, 0
    %v284 = vsel %vm282, 65537, 0
    %v285 = vunpack.c.l.b16 %v283
    %v286 = vunpack.c.l.b16 %v284
    %vm287 = vcmp.ne.s32.totalorder %v285, 0
    %vm288 = vcmp.ne.s32.totalorder %v286, 0
    %v289 = vsel %vm287, %v268, -1e+30
    %v290 = vsel %vm288, %v269, -1e+30
    %vm291 = vcmask 130048
    %v292 = vsel %vm291, %v289, -inf
    %293 = vmax.xlane.f32.xlu0 %v292
    %v294 = vpop.xlane.xlu0 %293
    %v295 = vsel %vm291, %v290, -inf
    %296 = vmax.xlane.f32.xlu0 %v295
    %v297 = vpop.xlane.xlu0 %296
    %v298 = vsub.f32 %v289, %v294
    %v299 = vsub.f32 %v290, %v297
    %v300 = vmul.f32 %v298, 1.442695
    %v301 = vpow.pop %v300
    %v302 = vmul.f32 %v299, 1.442695
    %v303 = vpow.pop %v302
    %v304 = vsel %vm291, %v301, 0.0
    %305 = vadd.xlane.f32.xlu0 %v304
    %v306 = vpop.xlane.xlu0 %305
    %v307 = vsel %vm291, %v303, 0.0
    %308 = vadd.xlane.f32.xlu0 %v307
    %v309 = vpop.xlane.xlu0 %308
    %v310 = vrcp.pop %v306
    %v311 = vrcp.pop %v309
    %v312 = vmul.f32 %v301, %v310
    %v313 = vmul.f32 %v303, %v311
    %v314 = vpack.c.bf16 %v313, %v312
    %v315 = vld [vmem:[%s5] sm:$0x1]
    %v317 = vlaneseq
    %v318 = vshrl.u32 %v317, 7
    %v319 = vsub.s32 0, %v318
    %v320 = vrot.slane %v315, %v319
    %v323 = vsel %vm291, %v314, 0
    %325 = vmatprep.subr.bf16.mxu0 0
    %326 = vmatpush1.bf16.msra.mxu0 %v203
    %327 = vmatprep.subr.bf16.mxu0 0
    %328 = vmatpush1.bf16.msra.mxu0 0
    %329 = vmatprep.subr.bf16.mxu0 0
    %330 = vmatpush1.bf16.msra.mxu0 0
    %331 = vmatprep.subr.bf16.mxu0 0
    %332 = vmatpush1.bf16.msra.mxu0 0
    %333 = vmatprep.subr.bf16.mxu0 0
    %334 = vmatpush1.bf16.msra.mxu0 0
    %335 = vmatprep.subr.bf16.mxu0 0
    %336 = vmatpush1.bf16.msra.mxu0 0
    %337 = vmatprep.subr.bf16.mxu0 0
    %338 = vmatpush1.bf16.msra.mxu0 0
    %339 = vmatprep.subr.bf16.mxu0 0
    %340 = vmatpush1.bf16.msra.mxu0 0
    %341 = vmatprep.subr.bf16.mxu0 0
    %342 = vmatpush1.bf16.msra.mxu0 0
    %343 = vmatprep.subr.bf16.mxu0 0
    %344 = vmatpush1.bf16.msra.mxu0 0
    %345 = vmatprep.subr.bf16.mxu0 0
    %346 = vmatpush1.bf16.msra.mxu0 0
    %347 = vmatprep.subr.bf16.mxu0 0
    %348 = vmatpush1.bf16.msra.mxu0 0
    %349 = vmatprep.subr.bf16.mxu0 0
    %350 = vmatpush1.bf16.msra.mxu0 0
    %351 = vmatprep.subr.bf16.mxu0 0
    %352 = vmatpush1.bf16.msra.mxu0 0
    %353 = vmatprep.subr.bf16.mxu0 0
    %354 = vmatpush1.bf16.msra.mxu0 0
    %355 = vmatprep.subr.bf16.mxu0 0
    %356 = vmatpush1.bf16.msra.mxu0 0
    %357 = vmatprep.mubr.bf16.mxu0 0
    %358 = vmatmul.mubr.bf16.gmra.mrb[0].mxu0 %v323
    %v359 = vpop.f32.mrb[0].mxu0
    %v360 = vadd.f32 %v320, %v359
    %v361 = vpop.f32.mrb[0].mxu0
    %v362 = vpop.f32.mrb[0].mxu0
    %v363 = vadd.f32 %v320, %v362
    %v364 = vpop.f32.mrb[0].mxu0
    %365 = vdwg.mxu0
    %v366 = vpack.c.bf16 %v363, %v360
    %v367 = vunpack.c.l.bf16 %v90
    %v368 = vsel %vm291, %v367, 0.0
    %369 = vadd.xlane.f32.xlu0 %v368
    %v370 = vpop.xlane.xlu0 %369
    %v372 = vsel %vm291, %v90, 0
    %374 = vmatprep.subr.bf16.mxu0 0
    %375 = vmatpush1.bf16.msra.mxu0 %v366
    %376 = vmatprep.subr.bf16.mxu0 0
    %377 = vmatpush1.bf16.msra.mxu0 0
    %378 = vmatprep.subr.bf16.mxu0 0
    %379 = vmatpush1.bf16.msra.mxu0 0
    %380 = vmatprep.subr.bf16.mxu0 0
    %381 = vmatpush1.bf16.msra.mxu0 0
    %382 = vmatprep.subr.bf16.mxu0 0
    %383 = vmatpush1.bf16.msra.mxu0 0
    %384 = vmatprep.subr.bf16.mxu0 0
    %385 = vmatpush1.bf16.msra.mxu0 0
    %386 = vmatprep.subr.bf16.mxu0 0
    %387 = vmatpush1.bf16.msra.mxu0 0
    %388 = vmatprep.subr.bf16.mxu0 0
    %389 = vmatpush1.bf16.msra.mxu0 0
    %390 = vmatprep.subr.bf16.mxu0 0
    %391 = vmatpush1.bf16.msra.mxu0 0
    %392 = vmatprep.subr.bf16.mxu0 0
    %393 = vmatpush1.bf16.msra.mxu0 0
    %394 = vmatprep.subr.bf16.mxu0 0
    %395 = vmatpush1.bf16.msra.mxu0 0
    %396 = vmatprep.subr.bf16.mxu0 0
    %397 = vmatpush1.bf16.msra.mxu0 0
    %398 = vmatprep.subr.bf16.mxu0 0
    %399 = vmatpush1.bf16.msra.mxu0 0
    %400 = vmatprep.subr.bf16.mxu0 0
    %401 = vmatpush1.bf16.msra.mxu0 0
    %402 = vmatprep.subr.bf16.mxu0 0
    %403 = vmatpush1.bf16.msra.mxu0 0
    %404 = vmatprep.subr.bf16.mxu0 0
    %405 = vmatpush1.bf16.msra.mxu0 0
    %406 = vmatprep.mubr.bf16.mxu0 0
    %407 = vmatmul.mubr.bf16.gmra.mrb[0].mxu0 %v372
    %v408 = vpop.f32.mrb[0].mxu0
    %v409 = vadd.f32 0.0, %v408
    %v410 = vpop.f32.mrb[0].mxu0
    %v411 = vpop.f32.mrb[0].mxu0
    %v412 = vpop.f32.mrb[0].mxu0
    %413 = vdwg.mxu0
    %vm414 = vcmp.gt.f32.partialorder %v370, 0.0
    %v415 = vrcp.pop %v370
    %v416 = vmul.f32 1.0, %v415
    %v417 = vsel %vm414, %v416, 0.0
    %v418 = vmul.f32 %v409, %v417
    %v419 = vpack.c.bf16 %v418, %v418
    %v420 = vpack.c.bf16 %v360, %v360
    %v421 = vld [vmem:[#allocation8] sm:$0xf]
    %v422 = vld [vmem:[#allocation8 + $0x4] sm:$0xf]
    %v423 = vld [vmem:[#allocation8 + $0x8] sm:$0xf]
    %v424 = vld [vmem:[#allocation8 + $0xc] sm:$0xf]
    %v425 = vld [vmem:[#allocation8 + $0x10] sm:$0xf]
    %v426 = vld [vmem:[#allocation8 + $0x14] sm:$0xf]
    %v427 = vld [vmem:[#allocation8 + $0x18] sm:$0xf]
    %v428 = vld [vmem:[#allocation8 + $0x1c] sm:$0xf]
    %v429 = vld [vmem:[#allocation8 + $0x20] sm:$0xf]
    %v430 = vld [vmem:[#allocation8 + $0x24] sm:$0xf]
    %v431 = vld [vmem:[#allocation8 + $0x28] sm:$0xf]
    %v432 = vld [vmem:[#allocation8 + $0x2c] sm:$0xf]
    %v433 = vld [vmem:[#allocation8 + $0x30] sm:$0xf]
    %v434 = vld [vmem:[#allocation8 + $0x34] sm:$0xf]
    %v435 = vld [vmem:[#allocation8 + $0x38] sm:$0xf]
    %v436 = vld [vmem:[#allocation8 + $0x3c] sm:$0xf]
    %v437 = vld [vmem:[#allocation8 + $0x40] sm:$0xf]
    %v438 = vld [vmem:[#allocation8 + $0x44] sm:$0xf]
    %v439 = vld [vmem:[#allocation8 + $0x48] sm:$0xf]
    %v440 = vld [vmem:[#allocation8 + $0x4c] sm:$0xf]
    %v441 = vld [vmem:[#allocation8 + $0x50] sm:$0xf]
    %v442 = vld [vmem:[#allocation8 + $0x54] sm:$0xf]
    %v443 = vld [vmem:[#allocation8 + $0x58] sm:$0xf]
    %v444 = vld [vmem:[#allocation8 + $0x5c] sm:$0xf]
    %v445 = vld [vmem:[#allocation8 + $0x60] sm:$0xf]
    %v446 = vld [vmem:[#allocation8 + $0x64] sm:$0xf]
    %v447 = vld [vmem:[#allocation8 + $0x68] sm:$0xf]
    %v448 = vld [vmem:[#allocation8 + $0x6c] sm:$0xf]
    %v449 = vld [vmem:[#allocation8 + $0x70] sm:$0xf]
    %v450 = vld [vmem:[#allocation8 + $0x74] sm:$0xf]
    %v451 = vld [vmem:[#allocation8 + $0x78] sm:$0xf]
    %v452 = vld [vmem:[#allocation8 + $0x7c] sm:$0xf]
    %v453 = vld [vmem:[%s7] sm:$0x1]
    %v455 = vlaneseq
    %v456 = vshrl.u32 %v455, 7
    %v457 = vsub.s32 0, %v456
    %v458 = vrot.slane %v453, %v457
    %v492 = vunpack.c.l.b16 %v421
    %v493 = vunpack.c.l.b16 %v422
    %v494 = vunpack.c.l.b16 %v423
    %v495 = vunpack.c.l.b16 %v424
    %v496 = vunpack.c.l.b16 %v425
    %v497 = vunpack.c.l.b16 %v426
    %v498 = vunpack.c.l.b16 %v427
    %v499 = vunpack.c.l.b16 %v428
    %v500 = vunpack.c.l.b16 %v429
    %v501 = vunpack.c.l.b16 %v430
    %v502 = vunpack.c.l.b16 %v431
    %v503 = vunpack.c.l.b16 %v432
    %v504 = vunpack.c.l.b16 %v433
    %v505 = vunpack.c.l.b16 %v434
    %v506 = vunpack.c.l.b16 %v435
    %v507 = vunpack.c.l.b16 %v436
    %v508 = vunpack.c.l.b16 %v437
    %v509 = vunpack.c.l.b16 %v438
    %v510 = vunpack.c.l.b16 %v439
    %v511 = vunpack.c.l.b16 %v440
    %v512 = vunpack.c.l.b16 %v441
    %v513 = vunpack.c.l.b16 %v442
    %v514 = vunpack.c.l.b16 %v443
    %v515 = vunpack.c.l.b16 %v444
    %v516 = vunpack.c.l.b16 %v445
    %v517 = vunpack.c.l.b16 %v446
    %v518 = vunpack.c.l.b16 %v447
    %v519 = vunpack.c.l.b16 %v448
    %v520 = vunpack.c.l.b16 %v449
    %v521 = vunpack.c.l.b16 %v450
    %v522 = vunpack.c.l.b16 %v451
    %v523 = vunpack.c.l.b16 %v452
    %v524 = vpack.c.b16 %v493, %v492
    %v525 = vpack.c.b16 %v495, %v494
    %v526 = vpack.c.b16 %v497, %v496
    %v527 = vpack.c.b16 %v499, %v498
    %v528 = vpack.c.b16 %v501, %v500
    %v529 = vpack.c.b16 %v503, %v502
    %v530 = vpack.c.b16 %v505, %v504
    %v531 = vpack.c.b16 %v507, %v506
    %v532 = vpack.c.b16 %v509, %v508
    %v533 = vpack.c.b16 %v511, %v510
    %v534 = vpack.c.b16 %v513, %v512
    %v535 = vpack.c.b16 %v515, %v514
    %v536 = vpack.c.b16 %v517, %v516
    %v537 = vpack.c.b16 %v519, %v518
    %v538 = vpack.c.b16 %v521, %v520
    %v539 = vpack.c.b16 %v523, %v522
    %556 = vmatprep.subr.bf16.mxu0 0
    %557 = vmatpush1.bf16.msra.mxu0 %v524
    %558 = vmatprep.subr.bf16.mxu0 0
    %559 = vmatpush1.bf16.msra.mxu0 %v525
    %560 = vmatprep.subr.bf16.mxu0 0
    %561 = vmatpush1.bf16.msra.mxu0 %v526
    %562 = vmatprep.subr.bf16.mxu0 0
    %563 = vmatpush1.bf16.msra.mxu0 %v527
    %564 = vmatprep.subr.bf16.mxu0 0
    %565 = vmatpush1.bf16.msra.mxu0 %v528
    %566 = vmatprep.subr.bf16.mxu0 0
    %567 = vmatpush1.bf16.msra.mxu0 %v529
    %568 = vmatprep.subr.bf16.mxu0 0
    %569 = vmatpush1.bf16.msra.mxu0 %v530
    %570 = vmatprep.subr.bf16.mxu0 0
    %571 = vmatpush1.bf16.msra.mxu0 %v531
    %572 = vmatprep.subr.bf16.mxu0 0
    %573 = vmatpush1.bf16.msra.mxu0 %v532
    %574 = vmatprep.subr.bf16.mxu0 0
    %575 = vmatpush1.bf16.msra.mxu0 %v533
    %576 = vmatprep.subr.bf16.mxu0 0
    %577 = vmatpush1.bf16.msra.mxu0 %v534
    %578 = vmatprep.subr.bf16.mxu0 0
    %579 = vmatpush1.bf16.msra.mxu0 %v535
    %580 = vmatprep.subr.bf16.mxu0 0
    %581 = vmatpush1.bf16.msra.mxu0 %v536
    %582 = vmatprep.subr.bf16.mxu0 0
    %583 = vmatpush1.bf16.msra.mxu0 %v537
    %584 = vmatprep.subr.bf16.mxu0 0
    %585 = vmatpush1.bf16.msra.mxu0 %v538
    %586 = vmatprep.subr.bf16.mxu0 0
    %587 = vmatpush1.bf16.msra.mxu0 %v539
    %588 = vmatprep.mubr.bf16.mxu0 %v420
    %589 = vmatmul.mubr.bf16.gmra.mrb[0].mxu0 %v419
    %v590 = vpop.f32.mrb[0].mxu0
    %v591 = vadd.f32 %v458, %v590
    %v592 = vpop.f32.mrb[0].mxu0
    %v593 = vpop.f32.mrb[0].mxu0
    %v594 = vpop.f32.mrb[0].mxu0
    %595 = vdwg.mxu0
    %v596 = vmul.f32 %v591, %v591
    %597 = vadd.xlane.f32.xlu0 %v596
    %v598 = vpop.xlane.xlu0 %597
    %vm599 = vcmp.gt.f32.partialorder %v598, 0.0
    %v600 = vrsqrt.pop %v598
    %v601 = vsel %vm599, %v600, 0.0
    %v602 = vmul.f32 %v591, %v601
    %603 = vst [vmem:[#allocation10] sm:$0xff] %v602
    // Predicated region
    $region50: #{tpu_custom_call.1} parent=1 // pred_check
      _
    $region51: #{tpu_custom_call.1} parent=1 // pred_check_branch
      %605 = sbr.rel (0) target = $region53
    $region52: #{tpu_custom_call.1} parent=1 // pred_region
      %s607 = ssub.s32 128, 128
      %608 = vsyncadd [#allocation4], %s607
      %s610 = sshll.u32 [#allocation10], 4
      %s611 = int_to_ptr.vmem [resolvable:$true] %s610
      %613 = dma.vmem_to_hbm [thread:$0]  %s611, 128, %s8, [#allocation4]
    $region53: #{tpu_custom_call.1} parent=1 // pred_fallthru
      _
    // Predicated region
    $region54: #{tpu_custom_call.1} parent=1 // pred_check
      _
    $region55: #{tpu_custom_call.1} parent=1 // pred_check_branch
      %615 = sbr.rel (0) target = $region57
    $region56: #{tpu_custom_call.1} parent=1 // pred_region
      %616 = dma.done [#allocation4], 128
    $region57: #{tpu_custom_call.1} parent=1 // pred_fallthru
      _
    %617 = vsyncpa [#allocation3], 1
    %618 = vsyncpa [#allocation6], 1
    %619 = vsyncpa [#allocation9], 1
    %620 = vsyncpa [#allocation4], 1

</llo_original>
